<compile_context>
chip_gen: v7x
topology: tpu7x:2x2x1
jax: 0.10.0
libtpu: 0.0.40
codegen_flags: <defaults>
</compile_context>

<pallas_src>
import functools

import jax
import jax.numpy as jnp
from jax import lax
from jax.experimental import pallas as pl
from jax.experimental.pallas import tpu as pltpu


def _mlp_kernel(x_ref, w1_ref, b1_ref, w2_ref, b2_ref, o_ref, acc_ref, *, act):
    # x_ref:  (tm, H_pad)      activation rows (constant across the I axis)
    # w1_ref: (tn, H_pad)      fc1 weight slice, nn.Linear (out, in) layout, bf16
    # b1_ref: (1, tn)          fc1 bias slice, f32
    # w2_ref: (H_pad, tn)      fc2 weight slice, nn.Linear (out, in) layout, bf16
    # b2_ref: (1, H_pad)       fc2 bias, f32
    # o_ref:  (tm, H_pad)      output rows
    # acc_ref:(tm, H_pad) f32  fc2 accumulator (VMEM scratch)
    k = pl.program_id(1)

    @pl.when(k == 0)
    def _():
        acc_ref[...] = jnp.zeros_like(acc_ref)

    # fc1 chunk: contract x's last dim against w1's last (in-features) dim, so
    # the nn.Linear (out, in) layout feeds the MXU transpose-free.
    x = x_ref[...].astype(jnp.bfloat16)
    h = lax.dot_general(
        x, w1_ref[...],
        dimension_numbers=(((1,), (1,)), ((), ())),
        preferred_element_type=jnp.float32,
    )  # (tm, tn) f32
    h = h + b1_ref[...]

    if act == "quick_gelu":
        # quick_gelu: x * sigmoid(1.702 * x); divide on the EUP via vrcp.
        h = h * pl.reciprocal(1.0 + jnp.exp(-1.702 * h), approx=True)
    elif act == "gelu":
        h = jax.nn.gelu(h, approximate=False)          # exact erf GELU
    elif act in ("gelu_new", "gelu_pytorch_tanh"):
        h = jax.nn.gelu(h, approximate=True)           # tanh approximation
    else:
        raise NotImplementedError(f"hidden_act={act!r}")

    # fc2 partial: (tm, tn) @ (H_pad, tn)^T -> (tm, H_pad); f32 accumulate.
    acc_ref[...] += lax.dot_general(
        h.astype(jnp.bfloat16), w2_ref[...],
        dimension_numbers=(((1,), (1,)), ((), ())),
        preferred_element_type=jnp.float32,
    )

    @pl.when(k == pl.num_programs(1) - 1)
    def _():
        o_ref[...] = (acc_ref[...] + b2_ref[...]).astype(o_ref.dtype)


def altclip_mlp(hidden_states, fc1_w, fc1_b, fc2_w, fc2_b, *, act="quick_gelu"):
    """hidden_states: (B, S, H); fc1_w: (I, H), fc1_b: (I,); fc2_w: (H, I),
    fc2_b: (H,)  — nn.Linear [out, in] layout. Returns (B, S, H)."""
    B, S, H = hidden_states.shape
    I = fc1_w.shape[0]
    dtype = hidden_states.dtype

    def rup(v, m):
        return (v + m - 1) // m * m

    M = B * S
    x = hidden_states.reshape(M, H)  # contiguous flatten, no data movement

    # ---- tile sizing -------------------------------------------------------
    H_pad = rup(H, 128)                 # fc1 in-features / fc2 out-features
    I_pad = rup(I, 128)                 # intermediate size
    M_pad = rup(max(M, 8), 8)

    tm = min(256, M_pad)                # row tile (parallel axis)
    if M_pad // tm < 2:                 # give megacore (v7x) >= 2 row steps
        tm = max(8, rup((M_pad + 1) // 2, 8))
    M_pad = rup(M_pad, tm)

    tn = 128                            # intermediate-dim tile (arbitrary axis)
    for cand in (1024, 512, 256, 128):
        if I_pad % cand == 0:
            tn = cand
            break

    # ---- padding (no-ops at real model sizes) ------------------------------
    if (M_pad, H_pad) != (M, H):
        x = jnp.pad(x, ((0, M_pad - M), (0, H_pad - H)))
    if (I_pad, H_pad) != (I, H):
        fc1_w = jnp.pad(fc1_w, ((0, I_pad - I), (0, H_pad - H)))
        fc1_b = jnp.pad(fc1_b, (0, I_pad - I))
        fc2_w = jnp.pad(fc2_w, ((0, H_pad - H), (0, I_pad - I)))
        fc2_b = jnp.pad(fc2_b, (0, H_pad - H))

    # Host-side (one-time) bf16 weight cast: halves weight DMA bytes and VMEM
    # residency, removes per-step in-kernel casts.  Biases stay f32.
    w1 = fc1_w.astype(jnp.bfloat16)
    w2 = fc2_w.astype(jnp.bfloat16)
    b1 = fc1_b.astype(jnp.float32).reshape(1, I_pad)
    b2 = fc2_b.astype(jnp.float32).reshape(1, H_pad)

    # ---- explicit VMEM budget ----------------------------------------------
    act_bytes = jnp.dtype(dtype).itemsize
    vmem_need = (
        2 * tm * H_pad * act_bytes      # x tiles (double-buffered)
        + 2 * tn * H_pad * 2            # fc1 weight tiles (bf16, double-buffered)
        + 2 * H_pad * tn * 2            # fc2 weight tiles (bf16, double-buffered)
        + 2 * tm * H_pad * act_bytes    # output tiles (double-buffered)
        + tm * H_pad * 4                # f32 accumulator scratch
        + 2 * 8 * tn * 4                # fc1 bias tiles (sublane-padded)
        + 2 * 8 * H_pad * 4             # fc2 bias tiles (sublane-padded)
        + 2 * tm * tn * 4               # live h chunk (f32 + bf16 copy)
    )
    vmem_limit = int(min(max(vmem_need + (4 << 20), 32 << 20), 56 << 20))

    kernel = functools.partial(_mlp_kernel, act=act)

    out = pl.pallas_call(
        kernel,
        out_shape=jax.ShapeDtypeStruct((M_pad, H_pad), dtype),
        grid_spec=pltpu.PrefetchScalarGridSpec(
            num_scalar_prefetch=0,
            grid=(M_pad // tm, I_pad // tn),
            in_specs=[
                pl.BlockSpec((tm, H_pad), lambda i, k: (i, 0)),    # activations
                pl.BlockSpec((tn, H_pad), lambda i, k: (k, 0)),    # fc1 w slice
                pl.BlockSpec((1, tn), lambda i, k: (0, k)),        # fc1 b slice
                pl.BlockSpec((H_pad, tn), lambda i, k: (0, k)),    # fc2 w slice
                pl.BlockSpec((1, H_pad), lambda i, k: (0, 0)),     # fc2 b
            ],
            out_specs=pl.BlockSpec((tm, H_pad), lambda i, k: (i, 0)),
            scratch_shapes=[pltpu.VMEM((tm, H_pad), jnp.float32)],
        ),
        compiler_params=pltpu.CompilerParams(
            dimension_semantics=("parallel", "arbitrary"),
            vmem_limit_bytes=vmem_limit,
        ),
    )(x, w1, b1, w2, b2)

    return out[:M, :H].reshape(B, S, H)


if __name__ == "__main__":
    # Small shapes consistent with the module: batch=2, seq=8, hidden=32,
    # intermediate = 4 * hidden (CLIP convention).
    B, S, H = 2, 8, 32
    I = 4 * H
    key = jax.random.PRNGKey(0)
    kx, k1, k2, k3, k4 = jax.random.split(key, 5)

    hidden_states = jax.random.normal(kx, (B, S, H), dtype=jnp.float32)
    fc1_w = jax.random.normal(k1, (I, H), dtype=jnp.float32) * 0.02
    fc1_b = jax.random.normal(k2, (I,), dtype=jnp.float32) * 0.02
    fc2_w = jax.random.normal(k3, (H, I), dtype=jnp.float32) * 0.02
    fc2_b = jax.random.normal(k4, (H,), dtype=jnp.float32) * 0.02

    out = altclip_mlp(hidden_states, fc1_w, fc1_b, fc2_w, fc2_b)
    out = jax.block_until_ready(out)

    # Reference in plain JAX (f32). Kernel matmuls run in bf16 with f32
    # accumulation, so use a tolerance consistent with bf16 rounding.
    h = hidden_states @ fc1_w.T + fc1_b
    h = h * jax.nn.sigmoid(1.702 * h)          # quick_gelu
    ref = h @ fc2_w.T + fc2_b

    assert out.shape == (B, S, H)
    assert jnp.allclose(out, ref, atol=1e-2, rtol=1e-2), float(
        jnp.max(jnp.abs(out - ref)))
    print("KERNEL_OK")
</pallas_src>

<mosaic_0001>
module attributes {stable_mosaic.version = 11 : i64} {
  func.func @_mlp_kernel(%arg0: i32, %arg1: i32, %arg2: memref<8x128xf32, #tpu.memory_space<vmem>>, %arg3: memref<128x128xbf16, #tpu.memory_space<vmem>>, %arg4: memref<1x128xf32, #tpu.memory_space<vmem>>, %arg5: memref<128x128xbf16, #tpu.memory_space<vmem>>, %arg6: memref<1x128xf32, #tpu.memory_space<vmem>>, %arg7: memref<8x128xf32, #tpu.memory_space<vmem>>, %arg8: memref<8x128xf32, #tpu.memory_space<vmem>>) attributes {dimension_semantics = [#tpu.dimension_semantics<parallel>, #tpu.dimension_semantics<arbitrary>], iteration_bounds = array<i64: 2, 1>, scalar_prefetch = 0 : i64, scratch_operands = 1 : i64, tpu.core_type = #tpu.core_type<tc>, window_params = [{transform_indices = @transform_0, window_bounds = array<i64: 8, 128>}, {transform_indices = @transform_1, window_bounds = array<i64: 128, 128>}, {transform_indices = @transform_2, window_bounds = array<i64: 1, 128>}, {transform_indices = @transform_3, window_bounds = array<i64: 128, 128>}, {pipeline_mode = #tpu.pipeline_mode<synchronous>, transform_indices = @transform_4, window_bounds = array<i64: 1, 128>}, {transform_indices = @transform_5, window_bounds = array<i64: 8, 128>}]} {
    %c0_i32 = arith.constant 0 : i32
    %0 = arith.cmpi eq, %arg1, %c0_i32 : i32
    %1 = arith.extui %0 : i1 to i32
    %c0_i32_0 = arith.constant 0 : i32
    %2 = arith.cmpi ne, %1, %c0_i32_0 : i32
    scf.if %2 {
      %cst_17 = arith.constant 0.000000e+00 : f32
      %26 = vector.broadcast %cst_17 : f32 to vector<8x128xf32>
      %c0_18 = arith.constant 0 : index
      %c0_19 = arith.constant 0 : index
      %27 = vector.load %arg8[%c0_18, %c0_19] : memref<8x128xf32, #tpu.memory_space<vmem>>, vector<8x128xf32>
      tpu.vector_store %arg8[%c0_18, %c0_19], %26 {strides = array<i32>} : memref<8x128xf32, #tpu.memory_space<vmem>>, vector<8x128xf32>,
    } else {
    }
    %c0 = arith.constant 0 : index
    %c0_1 = arith.constant 0 : index
    %3 = vector.load %arg2[%c0, %c0_1] : memref<8x128xf32, #tpu.memory_space<vmem>>, vector<8x128xf32>
    %4 = arith.truncf %3 : vector<8x128xf32> to vector<8x128xbf16>
    %c0_2 = arith.constant 0 : index
    %c0_3 = arith.constant 0 : index
    %5 = vector.load %arg3[%c0_2, %c0_3] : memref<128x128xbf16, #tpu.memory_space<vmem>>, vector<128x128xbf16>
    %cst = arith.constant dense<0.000000e+00> : vector<8x128xf32>
    %6 = tpu.matmul %4, %5, %cst {dimension_numbers = #tpu.dot_dimension_numbers<[1], [1], [0], [0], [0, 0, 1, 0], [], []>} : vector<8x128xbf16>, vector<128x128xbf16>, vector<8x128xf32> -> vector<8x128xf32>
    %c0_4 = arith.constant 0 : index
    %c0_5 = arith.constant 0 : index
    %7 = vector.load %arg4[%c0_4, %c0_5] : memref<1x128xf32, #tpu.memory_space<vmem>>, vector<1x128xf32>
    %8 = vector.broadcast %7 : vector<1x128xf32> to vector<8x128xf32>
    %9 = arith.addf %6, %8 : vector<8x128xf32>
    %cst_6 = arith.constant -1.702000e+00 : f32
    %10 = vector.broadcast %cst_6 : f32 to vector<8x128xf32>
    %11 = arith.mulf %10, %9 : vector<8x128xf32>
    %12 = math.exp %11 : vector<8x128xf32>
    %cst_7 = arith.constant 1.000000e+00 : f32
    %13 = vector.broadcast %cst_7 : f32 to vector<8x128xf32>
    %14 = arith.addf %13, %12 : vector<8x128xf32>
    %15 = tpu.reciprocal %14 {approx = true} : vector<8x128xf32> -> vector<8x128xf32>
    %16 = arith.mulf %9, %15 : vector<8x128xf32>
    %c0_8 = arith.constant 0 : index
    %c0_9 = arith.constant 0 : index
    %17 = vector.load %arg8[%c0_8, %c0_9] : memref<8x128xf32, #tpu.memory_space<vmem>>, vector<8x128xf32>
    %18 = arith.truncf %16 : vector<8x128xf32> to vector<8x128xbf16>
    %c0_10 = arith.constant 0 : index
    %c0_11 = arith.constant 0 : index
    %19 = vector.load %arg5[%c0_10, %c0_11] : memref<128x128xbf16, #tpu.memory_space<vmem>>, vector<128x128xbf16>
    %cst_12 = arith.constant dense<0.000000e+00> : vector<8x128xf32>
    %20 = tpu.matmul %18, %19, %cst_12 {dimension_numbers = #tpu.dot_dimension_numbers<[1], [1], [0], [0], [0, 0, 1, 0], [], []>} : vector<8x128xbf16>, vector<128x128xbf16>, vector<8x128xf32> -> vector<8x128xf32>
    %21 = arith.addf %17, %20 : vector<8x128xf32>
    %c0_13 = arith.constant 0 : index
    %c0_14 = arith.constant 0 : index
    %22 = vector.load %arg8[%c0_13, %c0_14] : memref<8x128xf32, #tpu.memory_space<vmem>>, vector<8x128xf32>
    tpu.vector_store %arg8[%c0_13, %c0_14], %21 {strides = array<i32>} : memref<8x128xf32, #tpu.memory_space<vmem>>, vector<8x128xf32>,
    %c0_i32_15 = arith.constant 0 : i32
    %23 = arith.cmpi eq, %arg1, %c0_i32_15 : i32
    %24 = arith.extui %23 : i1 to i32
    %c0_i32_16 = arith.constant 0 : i32
    %25 = arith.cmpi ne, %24, %c0_i32_16 : i32
    scf.if %25 {
      %c0_17 = arith.constant 0 : index
      %c0_18 = arith.constant 0 : index
      %26 = vector.load %arg8[%c0_17, %c0_18] : memref<8x128xf32, #tpu.memory_space<vmem>>, vector<8x128xf32>
      %c0_19 = arith.constant 0 : index
      %c0_20 = arith.constant 0 : index
      %27 = vector.load %arg6[%c0_19, %c0_20] : memref<1x128xf32, #tpu.memory_space<vmem>>, vector<1x128xf32>
      %28 = vector.broadcast %27 : vector<1x128xf32> to vector<8x128xf32>
      %29 = arith.addf %26, %28 : vector<8x128xf32>
      %c0_21 = arith.constant 0 : index
      %c0_22 = arith.constant 0 : index
      %30 = vector.load %arg7[%c0_21, %c0_22] : memref<8x128xf32, #tpu.memory_space<vmem>>, vector<8x128xf32>
      tpu.vector_store %arg7[%c0_21, %c0_22], %29 {strides = array<i32>} : memref<8x128xf32, #tpu.memory_space<vmem>>, vector<8x128xf32>,
    } else {
    }
    return
  }
  func.func @transform_0(%arg0: i32, %arg1: i32) -> (i32, i32) {
    %c0_i32 = arith.constant 0 : i32
    %c0_i32_0 = arith.constant 0 : i32
    return %arg0, %c0_i32 : i32, i32
  }
  func.func @transform_1(%arg0: i32, %arg1: i32) -> (i32, i32) {
    %c0_i32 = arith.constant 0 : i32
    %c0_i32_0 = arith.constant 0 : i32
    return %arg1, %c0_i32 : i32, i32
  }
  func.func @transform_2(%arg0: i32, %arg1: i32) -> (i32, i32) {
    %c0_i32 = arith.constant 0 : i32
    %c0_i32_0 = arith.constant 0 : i32
    return %c0_i32, %arg1 : i32, i32
  }
  func.func @transform_3(%arg0: i32, %arg1: i32) -> (i32, i32) {
    %c0_i32 = arith.constant 0 : i32
    %c0_i32_0 = arith.constant 0 : i32
    return %c0_i32, %arg1 : i32, i32
  }
  func.func @transform_4(%arg0: i32, %arg1: i32) -> (i32, i32) {
    %c0_i32 = arith.constant 0 : i32
    %c0_i32_0 = arith.constant 0 : i32
    %c0_i32_1 = arith.constant 0 : i32
    return %c0_i32, %c0_i32_0 : i32, i32
  }
  func.func @transform_5(%arg0: i32, %arg1: i32) -> (i32, i32) {
    %c0_i32 = arith.constant 0 : i32
    %c0_i32_0 = arith.constant 0 : i32
    return %arg0, %c0_i32 : i32, i32
  }
}

</mosaic_0001>

<llo_original>
// kernel: tpu_custom_call.1
$region0: #{tpu_custom_call.1}
  #allocation0 [shape = 'u32[]', space=smem, size = 0x4, offset = 0x4, fixed_abs, tag = 'smem constant byte address 0x4 - core index']
  #allocation1 [shape = 'u32[144,128]{1,0:T(1,128)}', space=vmem, size = 0x12000, scoped, tag = 'internal scratch']
  #allocation2 [shape = 'f32[8,128]{1,0:T(8,128)}', space=vmem, size = 0x1000, scoped, tag = 'scratch operand']
  %s0 = inlined_call_operand.hbm [shape: f32[16,128], index: 0, kind: input, shape index: {}]
  %s1 = inlined_call_operand.hbm [shape: bf16[128,128], index: 1, kind: input, shape index: {}]
  %s2 = inlined_call_operand.vmem [shape: f32[1,128], index: 2, kind: input, shape index: {}]
  %s3 = inlined_call_operand.hbm [shape: bf16[128,128], index: 3, kind: input, shape index: {}]
  %s4 = inlined_call_operand.vmem [shape: f32[1,128], index: 4, kind: input, shape index: {}]
  %s5 = inlined_call_operand.hbm [shape: f32[16,128], index: 5, kind: output, shape index: {}]
  %s6 = sld [smem:[#allocation0]]
  $region73: #{tpu_custom_call.1} parent=0
    _
  %s8 = ssub.s32 1, %s6
  %s9 = scalar_select 0, %s8, %s6
  $region1: #{tpu_custom_call.1} parent=0
    #allocation3 [shape = 'u8[8192]{0}', space=vmem, size = 0x2000, scoped, tag = 'input window, operand 0']
    #allocation4 [shape = 's32[2]{0}', space=sflag, size = 0x8, scoped, tag = 'scoped memory for tpu_custom_call.1']
    #allocation5 [shape = 's32[2]{0}', space=sflag, size = 0x8, scoped, tag = 'scoped memory for tpu_custom_call.1']
    #allocation6 [shape = 'u8[32768]{0}', space=vmem, size = 0x8000, scoped, tag = 'input window, operand 1, single buffered']
    #allocation7 [shape = 's32[1]{0}', space=sflag, size = 0x4, scoped, tag = 'scoped memory for tpu_custom_call.1']
    #allocation8 [shape = 'u8[32768]{0}', space=vmem, size = 0x8000, scoped, tag = 'input window, operand 3, single buffered']
    #allocation9 [shape = 'u8[8192]{0}', space=vmem, size = 0x2000, scoped, tag = 'output window, operand 0']
    %10 = vsyncpa [#allocation4], 0
    %s11 = scalar_lea.sflag [#allocation4], 1
    %12 = vsyncpa %s11, 0
    %13 = vsyncpa [#allocation7], 0
    %14 = vsyncpa [#allocation5], 0
    %s15 = scalar_lea.sflag [#allocation5], 1
    %16 = vsyncpa %s15, 0
    loop: start=0, step=1, limit=4
    $region2: #{tpu_custom_call.1} parent=1 // loop_pre_header
      _
    $region3: #{tpu_custom_call.1} parent=1 // loop_header
      %s18 = sphi 0, %s22
      %p19 = scmp.ge.s32.totalorder %s18, 4
      %s25 = sphi 0, %s37
      %s26 = sphi 0, %s33
      %s27 = sphi 0, %s25
      %s28 = sphi 0, %s26
      %s29 = sphi 0, %s27
      %s30 = sphi 0, %s28
      %s40 = sphi 0, %s42
      %s43 = sphi 0, %s40
      %s44 = sphi 0, %s43
      %s60 = sphi 0, %s44
      %s66 = sphi 0, %s68
      %s69 = sphi 0, %s66
      %s70 = sphi 0, %s69
      %s86 = sphi 0, %s70
      %s92 = sphi 0, %s94
      %s95 = sphi 0, %s92
      %s96 = sphi 0, %s95
      %s112 = sphi 0, %s96
      %s118 = sphi 0, %s120
      %s121 = sphi 0, %s118
      %s122 = sphi 0, %s121
      %s138 = sphi 0, %s122
      %s142 = sphi 0, %s142
      %s144 = sphi 0, %s142
      %s145 = sphi 0, %s144
      %s159 = sphi 0, %s145
      %s165 = sphi 0, %s167
      %s168 = sphi 0, %s165
      %s169 = sphi 0, %s168
      %s185 = sphi 0, %s169
    $region4: #{tpu_custom_call.1} parent=1 // loop_header_branch
      %21 = sbr.rel (%p19) target = $region8
    $region5: #{tpu_custom_call.1} parent=1 // loop_body
      %s23 = ssub.s32 %s18, 1
      %s24 = ssub.s32 %s18, 2
      %s31 = sadd.s32 1, %s26
      %p32 = scmp.ge.s32.totalorder %s31, 1
      %s33 = scalar_select %p32, 0, %s31
      %s34 = sadd.s32 1, %s25
      %s35 = scalar_select %p32, %s34, %s25
      %p36 = scmp.ge.s32.totalorder %s35, 2
      %s37 = scalar_select %p36, 0, %s35
      %s38 = ssub.s32 %s25, %s37
      %p39 = scmp.eq.s32.totalorder %s38, 0
      %s41 = sadd.s32 %s40, 1
      %s42 = scalar_select %p39, %s40, %s41
      %p45 = pneg %p39
      %p46 = scmp.eq.s32.totalorder %s18, 1
      %p47 = por %p45, %p46
      %p48 = scmp.ne.s32.totalorder %s40, %s43
      %p49 = scmp.eq.s32.totalorder %s18, 0
      %p50 = por %p48, %p49
      %p51 = scmp.ne.s32.totalorder %s40, %s43
      %p52 = scmp.eq.s32.totalorder %s23, 1
      %p53 = por %p51, %p52
      %p54 = scmp.ne.s32.totalorder %s43, %s44
      %p55 = scmp.eq.s32.totalorder %s23, 0
      %p56 = por %p54, %p55
      %p57 = scmp.ne.s32.totalorder %s43, %s44
      %p58 = scmp.eq.s32.totalorder %s24, 1
      %p59 = por %p57, %p58
      %p61 = scmp.ne.s32.totalorder %s44, %s60
      %p62 = scmp.eq.s32.totalorder %s24, 0
      %p63 = por %p61, %p62
      %s64 = ssub.s32 %s26, %s33
      %p65 = scmp.eq.s32.totalorder %s64, 0
      %s67 = sadd.s32 %s66, 1
      %s68 = scalar_select %p65, %s66, %s67
      %p71 = pneg %p65
      %p72 = scmp.eq.s32.totalorder %s18, 1
      %p73 = por %p71, %p72
      %p74 = scmp.ne.s32.totalorder %s66, %s69
      %p75 = scmp.eq.s32.totalorder %s18, 0
      %p76 = por %p74, %p75
      %p77 = scmp.ne.s32.totalorder %s66, %s69
      %p78 = scmp.eq.s32.totalorder %s23, 1
      %p79 = por %p77, %p78
      %p80 = scmp.ne.s32.totalorder %s69, %s70
      %p81 = scmp.eq.s32.totalorder %s23, 0
      %p82 = por %p80, %p81
      %p83 = scmp.ne.s32.totalorder %s69, %s70
      %p84 = scmp.eq.s32.totalorder %s24, 1
      %p85 = por %p83, %p84
      %p87 = scmp.ne.s32.totalorder %s70, %s86
      %p88 = scmp.eq.s32.totalorder %s24, 0
      %p89 = por %p87, %p88
      %s90 = ssub.s32 %s26, %s33
      %p91 = scmp.eq.s32.totalorder %s90, 0
      %s93 = sadd.s32 %s92, 1
      %s94 = scalar_select %p91, %s92, %s93
      %p97 = pneg %p91
      %p98 = scmp.eq.s32.totalorder %s18, 1
      %p99 = por %p97, %p98
      %p100 = scmp.ne.s32.totalorder %s92, %s95
      %p101 = scmp.eq.s32.totalorder %s18, 0
      %p102 = por %p100, %p101
      %p103 = scmp.ne.s32.totalorder %s92, %s95
      %p104 = scmp.eq.s32.totalorder %s23, 1
      %p105 = por %p103, %p104
      %p106 = scmp.ne.s32.totalorder %s95, %s96
      %p107 = scmp.eq.s32.totalorder %s23, 0
      %p108 = por %p106, %p107
      %p109 = scmp.ne.s32.totalorder %s95, %s96
      %p110 = scmp.eq.s32.totalorder %s24, 1
      %p111 = por %p109, %p110
      %p113 = scmp.ne.s32.totalorder %s96, %s112
      %p114 = scmp.eq.s32.totalorder %s24, 0
      %p115 = por %p113, %p114
      %s116 = ssub.s32 %s26, %s33
      %p117 = scmp.eq.s32.totalorder %s116, 0
      %s119 = sadd.s32 %s118, 1
      %s120 = scalar_select %p117, %s118, %s119
      %p123 = pneg %p117
      %p124 = scmp.eq.s32.totalorder %s18, 1
      %p125 = por %p123, %p124
      %p126 = scmp.ne.s32.totalorder %s118, %s121
      %p127 = scmp.eq.s32.totalorder %s18, 0
      %p128 = por %p126, %p127
      %p129 = scmp.ne.s32.totalorder %s118, %s121
      %p130 = scmp.eq.s32.totalorder %s23, 1
      %p131 = por %p129, %p130
      %p132 = scmp.ne.s32.totalorder %s121, %s122
      %p133 = scmp.eq.s32.totalorder %s23, 0
      %p134 = por %p132, %p133
      %p135 = scmp.ne.s32.totalorder %s121, %s122
      %p136 = scmp.eq.s32.totalorder %s24, 1
      %p137 = por %p135, %p136
      %p139 = scmp.ne.s32.totalorder %s122, %s138
      %p140 = scmp.eq.s32.totalorder %s24, 0
      %p141 = por %p139, %p140
      %s143 = sadd.s32 %s142, 1
      %p146 = scmp.eq.s32.totalorder %s18, 1
      %p147 = scmp.ne.s32.totalorder %s142, %s144
      %p148 = scmp.eq.s32.totalorder %s18, 0
      %p149 = por %p147, %p148
      %p150 = scmp.ne.s32.totalorder %s142, %s144
      %p151 = scmp.eq.s32.totalorder %s23, 1
      %p152 = por %p150, %p151
      %p153 = scmp.ne.s32.totalorder %s144, %s145
      %p154 = scmp.eq.s32.totalorder %s23, 0
      %p155 = por %p153, %p154
      %p156 = scmp.ne.s32.totalorder %s144, %s145
      %p157 = scmp.eq.s32.totalorder %s24, 1
      %p158 = por %p156, %p157
      %p160 = scmp.ne.s32.totalorder %s145, %s159
      %p161 = scmp.eq.s32.totalorder %s24, 0
      %p162 = por %p160, %p161
      %s163 = ssub.s32 %s25, %s37
      %p164 = scmp.eq.s32.totalorder %s163, 0
      %s166 = sadd.s32 %s165, 1
      %s167 = scalar_select %p164, %s165, %s166
      %p170 = pneg %p164
      %p171 = scmp.eq.s32.totalorder %s18, 1
      %p172 = por %p170, %p171
      %p173 = scmp.ne.s32.totalorder %s165, %s168
      %p174 = scmp.eq.s32.totalorder %s18, 0
      %p175 = por %p173, %p174
      %p176 = scmp.ne.s32.totalorder %s165, %s168
      %p177 = scmp.eq.s32.totalorder %s23, 1
      %p178 = por %p176, %p177
      %p179 = scmp.ne.s32.totalorder %s168, %s169
      %p180 = scmp.eq.s32.totalorder %s23, 0
      %p181 = por %p179, %p180
      %p182 = scmp.ne.s32.totalorder %s168, %s169
      %p183 = scmp.eq.s32.totalorder %s24, 1
      %p184 = por %p182, %p183
      %p186 = scmp.ne.s32.totalorder %s169, %s185
      %p187 = scmp.eq.s32.totalorder %s24, 0
      %p188 = por %p186, %p187
      %p189 = scmp.le.s32.totalorder 1, %s18
      %p190 = scmp.lt.s32.totalorder %s18, 3
      %p191 = pnand %p189, %p190
      %p192 = pneg %p191
      // Predicated region
      $region9: #{tpu_custom_call.1} parent=5 // pred_check
        _
      $region10: #{tpu_custom_call.1} parent=5 // pred_check_branch
        %194 = sbr.rel (%p191) target = $region12
      $region11: #{tpu_custom_call.1} parent=5 // pred_region
        %s195 = ssub.s32 %s18, 1
        // Predicated region
        $region13: #{tpu_custom_call.1} parent=11 // pred_check
          %p196 = pneg %p82
        $region14: #{tpu_custom_call.1} parent=11 // pred_check_branch
          %198 = sbr.rel (%p196) target = $region16
        $region15: #{tpu_custom_call.1} parent=11 // pred_region
          %s199 = smul.u32 16, %s28
          %s201 = ssub.s32 1024, 1024
          %202 = vsyncadd [#allocation7], %s201
          %s203 = smul.addr %s199, 64
          %s204 = scalar_lea.hbm %s1, %s203
          %s205 = sshll.u32 [#allocation6], 4
          %s206 = int_to_ptr.vmem [resolvable:$true] %s205
          %211 = dma.hbm_to_vmem [thread:$0]  %s204, 1024, %s206, [#allocation7], 64, 64, 4
        $region16: #{tpu_custom_call.1} parent=11 // pred_fallthru
          _
        // Predicated region
        $region17: #{tpu_custom_call.1} parent=11 // pred_check
          %p212 = pneg %p108
        $region18: #{tpu_custom_call.1} parent=11 // pred_check_branch
          %214 = sbr.rel (%p212) target = $region20
        $region19: #{tpu_custom_call.1} parent=11 // pred_region
          %p215 = scmp.lt.s32.totalorder %s28, 0
          %s216 = scalar_select %p215, %s28, 0
          %s217 = scalar_lea.vmem %s2, %s216
        $region20: #{tpu_custom_call.1} parent=11 // pred_fallthru
          _
        // Predicated region
        $region21: #{tpu_custom_call.1} parent=11 // pred_check
          %p218 = pneg %p134
        $region22: #{tpu_custom_call.1} parent=11 // pred_check_branch
          %220 = sbr.rel (%p218) target = $region24
        $region23: #{tpu_custom_call.1} parent=11 // pred_region
          %s222 = ssub.s32 1024, 1024
          %223 = vsyncadd [#allocation7], %s222
          %s224 = smul.addr %s28, 64
          %s225 = scalar_lea.hbm %s3, %s224
          %s226 = sshll.u32 [#allocation8], 4
          %s227 = int_to_ptr.vmem [resolvable:$true] %s226
          %232 = dma.hbm_to_vmem [thread:$0]  %s225, 1024, %s227, [#allocation7], 64, 64, 4
        $region24: #{tpu_custom_call.1} parent=11 // pred_fallthru
          _
        // Predicated region
        $region25: #{tpu_custom_call.1} parent=11 // pred_check
          %p233 = pneg %p155
        $region26: #{tpu_custom_call.1} parent=11 // pred_check_branch
          %235 = sbr.rel (%p233) target = $region28
        $region27: #{tpu_custom_call.1} parent=11 // pred_region
          _
        $region28: #{tpu_custom_call.1} parent=11 // pred_fallthru
          _
      $region12: #{tpu_custom_call.1} parent=5 // pred_fallthru
        _
      %p236 = scmp.lt.s32.totalorder %s18, 2
      // Predicated region
      $region29: #{tpu_custom_call.1} parent=5 // pred_check
        %p237 = pneg %p236
      $region30: #{tpu_custom_call.1} parent=5 // pred_check_branch
        %239 = sbr.rel (%p237) target = $region32
      $region31: #{tpu_custom_call.1} parent=5 // pred_region
        // Predicated region
        $region33: #{tpu_custom_call.1} parent=31 // pred_check
          %p240 = pneg %p50
        $region34: #{tpu_custom_call.1} parent=31 // pred_check_branch
          %242 = sbr.rel (%p240) target = $region36
        $region35: #{tpu_custom_call.1} parent=31 // pred_region
          %s243 = sand.u32 %s40, 1
          %s244 = scalar_lea.sflag [#allocation4], %s243
          %s245 = sand.u32 %s40, 1
          %s246 = smul.addr %s245, 8
          %s247 = scalar_lea.vmem [#allocation3], %s246
          %s249 = ssub.s32 128, 128
          %250 = vsyncadd %s244, %s249
          %s251 = smul.addr %s25, 128
          %s252 = scalar_lea.hbm %s0, %s251
          %s254 = sshll.u32 %s247, 4
          %s255 = int_to_ptr.vmem [resolvable:$true] %s254
          %257 = dma.hbm_to_vmem [thread:$0]  %s252, 128, %s255, %s244
        $region36: #{tpu_custom_call.1} parent=31 // pred_fallthru
          _
      $region32: #{tpu_custom_call.1} parent=5 // pred_fallthru
        _
      %p258 = scmp.le.s32.totalorder 1, %s18
      %p259 = scmp.lt.s32.totalorder %s18, 3
      %p260 = pnand %p258, %p259
      %p261 = pneg %p260
      // Predicated region
      $region37: #{tpu_custom_call.1} parent=5 // pred_check
        _
      $region38: #{tpu_custom_call.1} parent=5 // pred_check_branch
        %263 = sbr.rel (%p260) target = $region40
      $region39: #{tpu_custom_call.1} parent=5 // pred_region
        %s264 = ssub.s32 %s18, 1
        %s265 = sand.u32 %s43, 1
        %s266 = scalar_lea.sflag [#allocation4], %s265
        %s267 = sand.u32 %s43, 1
        %s268 = smul.addr %s267, 8
        %s269 = scalar_lea.vmem [#allocation3], %s268
        // Predicated region
        $region41: #{tpu_custom_call.1} parent=39 // pred_check
          %p270 = pneg %p56
        $region42: #{tpu_custom_call.1} parent=39 // pred_check_branch
          %272 = sbr.rel (%p270) target = $region44
        $region43: #{tpu_custom_call.1} parent=39 // pred_region
          %273 = dma.done %s266, 128
        $region44: #{tpu_custom_call.1} parent=39 // pred_fallthru
          _
        // Predicated region
        $region45: #{tpu_custom_call.1} parent=39 // pred_check
          %p274 = pneg %p82
        $region46: #{tpu_custom_call.1} parent=39 // pred_check_branch
          %276 = sbr.rel (%p274) target = $region48
        $region47: #{tpu_custom_call.1} parent=39 // pred_region
          %277 = dma.done [#allocation7], 1024
        $region48: #{tpu_custom_call.1} parent=39 // pred_fallthru
          _
        // Predicated region
        $region49: #{tpu_custom_call.1} parent=39 // pred_check
          %p278 = pneg %p134
        $region50: #{tpu_custom_call.1} parent=39 // pred_check_branch
          %280 = sbr.rel (%p278) target = $region52
        $region51: #{tpu_custom_call.1} parent=39 // pred_region
          %281 = dma.done [#allocation7], 1024
        $region52: #{tpu_custom_call.1} parent=39 // pred_fallthru
          _
        %s282 = sand.u32 %s43, 1
        %s283 = scalar_lea.sflag [#allocation4], %s282
        %s284 = sand.u32 %s43, 1
        %s285 = smul.addr %s284, 8
        %s286 = scalar_lea.vmem [#allocation3], %s285
        %p287 = pneg %p56
        %p288 = pneg %p53
        %p289 = pneg %p82
        %p290 = pneg %p79
        %p291 = scmp.lt.s32.totalorder %s28, 0
        %s292 = scalar_select %p291, %s28, 0
        %s293 = scalar_lea.vmem %s2, %s292
        %p294 = pneg %p108
        %p295 = pneg %p105
        %p296 = pneg %p134
        %p297 = pneg %p131
        %p298 = pneg %p155
        %p299 = pneg %p152
        %p300 = pneg %p181
        %p301 = pneg %p178
        %s302 = sand.u32 %s168, 1
        %s303 = scalar_lea.sflag [#allocation5], %s302
        %s304 = sand.u32 %s168, 1
        %s305 = smul.addr %s304, 8
        %s306 = scalar_lea.vmem [#allocation9], %s305
        %s307 = smul.u32 16, %s28
        %p308 = scmp.lt.s32.totalorder %s28, 0
        %s309 = scalar_select %p308, %s28, 0
        %s310 = scalar_lea.vmem %s2, %s309
        %p312 = scmp.eq.s32.totalorder %s28, 0
        // Predicated region
        $region53: #{tpu_custom_call.1} parent=39 // pred_check
          %p313 = pneg %p312
        $region54: #{tpu_custom_call.1} parent=39 // pred_check_branch
          %315 = sbr.rel (%p313) target = $region56
        $region55: #{tpu_custom_call.1} parent=39 // pred_region
          %316 = vst [vmem:[#allocation2] sm:$0xff] 0.0
        $region56: #{tpu_custom_call.1} parent=39 // pred_fallthru
          _
        %v317 = vld [vmem:[%s269] sm:$0xff]
        %v318 = vpack.c.bf16 %v317, %v317
        %v319 = vld [vmem:[#allocation6] sm:$0xf]
        %v320 = vld [vmem:[#allocation6 + $0x4] sm:$0xf]
        %v321 = vld [vmem:[#allocation6 + $0x8] sm:$0xf]
        %v322 = vld [vmem:[#allocation6 + $0xc] sm:$0xf]
        %v323 = vld [vmem:[#allocation6 + $0x10] sm:$0xf]
        %v324 = vld [vmem:[#allocation6 + $0x14] sm:$0xf]
        %v325 = vld [vmem:[#allocation6 + $0x18] sm:$0xf]
        %v326 = vld [vmem:[#allocation6 + $0x1c] sm:$0xf]
        %v327 = vld [vmem:[#allocation6 + $0x20] sm:$0xf]
        %v328 = vld [vmem:[#allocation6 + $0x24] sm:$0xf]
        %v329 = vld [vmem:[#allocation6 + $0x28] sm:$0xf]
        %v330 = vld [vmem:[#allocation6 + $0x2c] sm:$0xf]
        %v331 = vld [vmem:[#allocation6 + $0x30] sm:$0xf]
        %v332 = vld [vmem:[#allocation6 + $0x34] sm:$0xf]
        %v333 = vld [vmem:[#allocation6 + $0x38] sm:$0xf]
        %v334 = vld [vmem:[#allocation6 + $0x3c] sm:$0xf]
        %v335 = vld [vmem:[%s310] sm:$0x1]
        %v337 = vlaneseq
        %v338 = vshrl.u32 %v337, 7
        %v339 = vsub.s32 0, %v338
        %v340 = vrot.slane %v335, %v339
        %v358 = vunpack.c.l.b16 %v319
        %v359 = vunpack.c.l.b16 %v320
        %v360 = vunpack.c.l.b16 %v321
        %v361 = vunpack.c.l.b16 %v322
        %v362 = vunpack.c.l.b16 %v323
        %v363 = vunpack.c.l.b16 %v324
        %v364 = vunpack.c.l.b16 %v325
        %v365 = vunpack.c.l.b16 %v326
        %v366 = vunpack.c.l.b16 %v327
        %v367 = vunpack.c.l.b16 %v328
        %v368 = vunpack.c.l.b16 %v329
        %v369 = vunpack.c.l.b16 %v330
        %v370 = vunpack.c.l.b16 %v331
        %v371 = vunpack.c.l.b16 %v332
        %v372 = vunpack.c.l.b16 %v333
        %v373 = vunpack.c.l.b16 %v334
        %v374 = vpack.c.b16 %v359, %v358
        %v375 = vpack.c.b16 %v361, %v360
        %v376 = vpack.c.b16 %v363, %v362
        %v377 = vpack.c.b16 %v365, %v364
        %v378 = vpack.c.b16 %v367, %v366
        %v379 = vpack.c.b16 %v369, %v368
        %v380 = vpack.c.b16 %v371, %v370
        %v381 = vpack.c.b16 %v373, %v372
        %390 = vmatprep.subr.bf16.mxu0 0
        %391 = vmatpush1.bf16.xpose.msra.mxu0 %v374
        %392 = vmatprep.subr.bf16.mxu0 0
        %393 = vmatpush1.bf16.xpose.msra.mxu0 %v375
        %394 = vmatprep.subr.bf16.mxu0 0
        %395 = vmatpush1.bf16.xpose.msra.mxu0 %v376
        %396 = vmatprep.subr.bf16.mxu0 0
        %397 = vmatpush1.bf16.xpose.msra.mxu0 %v377
        %398 = vmatprep.subr.bf16.mxu0 0
        %399 = vmatpush1.bf16.xpose.msra.mxu0 %v378
        %400 = vmatprep.subr.bf16.mxu0 0
        %401 = vmatpush1.bf16.xpose.msra.mxu0 %v379
        %402 = vmatprep.subr.bf16.mxu0 0
        %403 = vmatpush1.bf16.xpose.msra.mxu0 %v380
        %404 = vmatprep.subr.bf16.mxu0 0
        %405 = vmatpush1.bf16.xpose.msra.mxu0 %v381
        %406 = vmatprep.subr.bf16.mxu0 0
        %407 = vmatpush1.bf16.xpose.msra.mxu0 0
        %408 = vmatprep.subr.bf16.mxu0 0
        %409 = vmatpush1.bf16.xpose.msra.mxu0 0
        %410 = vmatprep.subr.bf16.mxu0 0
        %411 = vmatpush1.bf16.xpose.msra.mxu0 0
        %412 = vmatprep.subr.bf16.mxu0 0
        %413 = vmatpush1.bf16.xpose.msra.mxu0 0
        %414 = vmatprep.subr.bf16.mxu0 0
        %415 = vmatpush1.bf16.xpose.msra.mxu0 0
        %416 = vmatprep.subr.bf16.mxu0 0
        %417 = vmatpush1.bf16.xpose.msra.mxu0 0
        %418 = vmatprep.subr.bf16.mxu0 0
        %419 = vmatpush1.bf16.xpose.msra.mxu0 0
        %420 = vmatprep.subr.bf16.mxu0 0
        %421 = vmatpush1.bf16.xpose.msra.mxu0 0
        %422 = vmatprep.mubr.bf16.mxu0 0
        %423 = vmatmul.mubr.bf16.gmra.mrb[0].mxu0 %v318
        %v424 = vpop.f32.mrb[0].mxu0
        %v425 = vadd.f32 %v340, %v424
        %v426 = vpop.f32.mrb[0].mxu0
        %v427 = vpop.f32.mrb[0].mxu0
        %v428 = vpop.f32.mrb[0].mxu0
        %429 = vdwg.mxu0
        %v430 = vmul.f32 %v425, -1.702
        %v431 = vmul.f32 %v430, 1.442695
        %v432 = vpow.pop %v431
        %v433 = vadd.f32 %v432, 1.0
        %v434 = vrcp.pop %v433
        %v435 = vmul.f32 %v425, %v434
        %v436 = vld [vmem:[#allocation2] sm:$0xff]
        %v437 = vpack.c.bf16 %v435, %v435
        %v438 = vld [vmem:[#allocation8] sm:$0xf]
        %v439 = vld [vmem:[#allocation8 + $0x4] sm:$0xf]
        %v440 = vld [vmem:[#allocation8 + $0x8] sm:$0xf]
        %v441 = vld [vmem:[#allocation8 + $0xc] sm:$0xf]
        %v442 = vld [vmem:[#allocation8 + $0x10] sm:$0xf]
        %v443 = vld [vmem:[#allocation8 + $0x14] sm:$0xf]
        %v444 = vld [vmem:[#allocation8 + $0x18] sm:$0xf]
        %v445 = vld [vmem:[#allocation8 + $0x1c] sm:$0xf]
        %v446 = vld [vmem:[#allocation8 + $0x20] sm:$0xf]
        %v447 = vld [vmem:[#allocation8 + $0x24] sm:$0xf]
        %v448 = vld [vmem:[#allocation8 + $0x28] sm:$0xf]
        %v449 = vld [vmem:[#allocation8 + $0x2c] sm:$0xf]
        %v450 = vld [vmem:[#allocation8 + $0x30] sm:$0xf]
        %v451 = vld [vmem:[#allocation8 + $0x34] sm:$0xf]
        %v452 = vld [vmem:[#allocation8 + $0x38] sm:$0xf]
        %v453 = vld [vmem:[#allocation8 + $0x3c] sm:$0xf]
        %v470 = vunpack.c.l.b16 %v438
        %v471 = vunpack.c.l.b16 %v439
        %v472 = vunpack.c.l.b16 %v440
        %v473 = vunpack.c.l.b16 %v441
        %v474 = vunpack.c.l.b16 %v442
        %v475 = vunpack.c.l.b16 %v443
        %v476 = vunpack.c.l.b16 %v444
        %v477 = vunpack.c.l.b16 %v445
        %v478 = vunpack.c.l.b16 %v446
        %v479 = vunpack.c.l.b16 %v447
        %v480 = vunpack.c.l.b16 %v448
        %v481 = vunpack.c.l.b16 %v449
        %v482 = vunpack.c.l.b16 %v450
        %v483 = vunpack.c.l.b16 %v451
        %v484 = vunpack.c.l.b16 %v452
        %v485 = vunpack.c.l.b16 %v453
        %v486 = vpack.c.b16 %v471, %v470
        %v487 = vpack.c.b16 %v473, %v472
        %v488 = vpack.c.b16 %v475, %v474
        %v489 = vpack.c.b16 %v477, %v476
        %v490 = vpack.c.b16 %v479, %v478
        %v491 = vpack.c.b16 %v481, %v480
        %v492 = vpack.c.b16 %v483, %v482
        %v493 = vpack.c.b16 %v485, %v484
        %502 = vmatprep.subr.bf16.mxu0 0
        %503 = vmatpush1.bf16.xpose.msra.mxu0 %v486
        %504 = vmatprep.subr.bf16.mxu0 0
        %505 = vmatpush1.bf16.xpose.msra.mxu0 %v487
        %506 = vmatprep.subr.bf16.mxu0 0
        %507 = vmatpush1.bf16.xpose.msra.mxu0 %v488
        %508 = vmatprep.subr.bf16.mxu0 0
        %509 = vmatpush1.bf16.xpose.msra.mxu0 %v489
        %510 = vmatprep.subr.bf16.mxu0 0
        %511 = vmatpush1.bf16.xpose.msra.mxu0 %v490
        %512 = vmatprep.subr.bf16.mxu0 0
        %513 = vmatpush1.bf16.xpose.msra.mxu0 %v491
        %514 = vmatprep.subr.bf16.mxu0 0
        %515 = vmatpush1.bf16.xpose.msra.mxu0 %v492
        %516 = vmatprep.subr.bf16.mxu0 0
        %517 = vmatpush1.bf16.xpose.msra.mxu0 %v493
        %518 = vmatprep.subr.bf16.mxu0 0
        %519 = vmatpush1.bf16.xpose.msra.mxu0 0
        %520 = vmatprep.subr.bf16.mxu0 0
        %521 = vmatpush1.bf16.xpose.msra.mxu0 0
        %522 = vmatprep.subr.bf16.mxu0 0
        %523 = vmatpush1.bf16.xpose.msra.mxu0 0
        %524 = vmatprep.subr.bf16.mxu0 0
        %525 = vmatpush1.bf16.xpose.msra.mxu0 0
        %526 = vmatprep.subr.bf16.mxu0 0
        %527 = vmatpush1.bf16.xpose.msra.mxu0 0
        %528 = vmatprep.subr.bf16.mxu0 0
        %529 = vmatpush1.bf16.xpose.msra.mxu0 0
        %530 = vmatprep.subr.bf16.mxu0 0
        %531 = vmatpush1.bf16.xpose.msra.mxu0 0
        %532 = vmatprep.subr.bf16.mxu0 0
        %533 = vmatpush1.bf16.xpose.msra.mxu0 0
        %534 = vmatprep.mubr.bf16.mxu0 0
        %535 = vmatmul.mubr.bf16.gmra.mrb[0].mxu0 %v437
        %v536 = vpop.f32.mrb[0].mxu0
        %v537 = vadd.f32 0.0, %v536
        %v538 = vpop.f32.mrb[0].mxu0
        %v539 = vpop.f32.mrb[0].mxu0
        %v540 = vpop.f32.mrb[0].mxu0
        %541 = vdwg.mxu0
        %v542 = vadd.f32 %v436, %v537
        %543 = vst [vmem:[#allocation2] sm:$0xff] %v542
        // Predicated region
        $region57: #{tpu_custom_call.1} parent=39 // pred_check
          %p544 = pneg %p312
        $region58: #{tpu_custom_call.1} parent=39 // pred_check_branch
          %546 = sbr.rel (%p544) target = $region60
        $region59: #{tpu_custom_call.1} parent=39 // pred_region
          %v547 = vld [vmem:[#allocation2] sm:$0xff]
          %v548 = vld [vmem:[%s4] sm:$0x1]
          %v550 = vlaneseq
          %v551 = vshrl.u32 %v550, 7
          %v552 = vsub.s32 0, %v551
          %v553 = vrot.slane %v548, %v552
          %v555 = vadd.f32 %v547, %v553
          %556 = vst [vmem:[%s306] sm:$0xff] %v555
        $region60: #{tpu_custom_call.1} parent=39 // pred_fallthru
          _
        %s557 = sand.u32 %s168, 1
        %s558 = scalar_lea.sflag [#allocation5], %s557
        %s559 = sand.u32 %s168, 1
        %s560 = smul.addr %s559, 8
        %s561 = scalar_lea.vmem [#allocation9], %s560
        // Predicated region
        $region61: #{tpu_custom_call.1} parent=39 // pred_check
          %p562 = pneg %p178
        $region62: #{tpu_custom_call.1} parent=39 // pred_check_branch
          %564 = sbr.rel (%p562) target = $region64
        $region63: #{tpu_custom_call.1} parent=39 // pred_region
          %s566 = ssub.s32 128, 128
          %567 = vsyncadd %s558, %s566
          %s568 = smul.addr %s27, 128
          %s569 = scalar_lea.hbm %s5, %s568
          %s571 = sshll.u32 %s561, 4
          %s572 = int_to_ptr.vmem [resolvable:$true] %s571
          %574 = dma.vmem_to_hbm [thread:$0]  %s572, 128, %s569, %s558
        $region64: #{tpu_custom_call.1} parent=39 // pred_fallthru
          _
      $region40: #{tpu_custom_call.1} parent=5 // pred_fallthru
        _
      %p575 = scmp.le.s32.totalorder 2, %s18
      // Predicated region
      $region65: #{tpu_custom_call.1} parent=5 // pred_check
        %p576 = pneg %p575
      $region66: #{tpu_custom_call.1} parent=5 // pred_check_branch
        %578 = sbr.rel (%p576) target = $region68
      $region67: #{tpu_custom_call.1} parent=5 // pred_region
        %s579 = ssub.s32 %s18, 2
        // Predicated region
        $region69: #{tpu_custom_call.1} parent=67 // pred_check
          %p580 = pneg %p184
        $region70: #{tpu_custom_call.1} parent=67 // pred_check_branch
          %582 = sbr.rel (%p580) target = $region72
        $region71: #{tpu_custom_call.1} parent=67 // pred_region
          %s583 = sand.u32 %s169, 1
          %s584 = scalar_lea.sflag [#allocation5], %s583
          %s585 = sand.u32 %s169, 1
          %s586 = smul.addr %s585, 8
          %s587 = scalar_lea.vmem [#allocation9], %s586
          %588 = dma.done %s584, 128
        $region72: #{tpu_custom_call.1} parent=67 // pred_fallthru
          _
      $region68: #{tpu_custom_call.1} parent=5 // pred_fallthru
        _
    $region6: #{tpu_custom_call.1} parent=1 // loop_footer
      %s22 = sadd.s32 1, %s18
    $region7: #{tpu_custom_call.1} parent=1 // loop_footer_branch
      %17 = sbr.rel target = $region3
    $region8: #{tpu_custom_call.1} parent=1 // loop_exit
      _
    %589 = vsyncpa [#allocation4], 1
    %s590 = scalar_lea.sflag [#allocation4], 1
    %591 = vsyncpa %s590, 1
    %592 = vsyncpa [#allocation7], 1
    %593 = vsyncpa [#allocation5], 1
    %s594 = scalar_lea.sflag [#allocation5], 1
    %595 = vsyncpa %s594, 1

</llo_original>
